<compile_context>
chip_gen: v7x
topology: tpu7x:2x2x1
jax: 0.10.0
libtpu: 0.0.40
codegen_flags: <defaults>
</compile_context>

<pallas_src>
import functools

import jax
import jax.numpy as jnp
from jax.experimental import pallas as pl
from jax.experimental.pallas import tpu as pltpu

BN_EPS = 1e-5
LANE = 128          # feature-dim padding (v5e MXU tile; TODO(synk): 256 on v6e/v7x)
STATS_ROWS = 8      # sublane-padded stats slab: row 0 = sum, row 1 = sum of squares


def _round_up(v, m):
    return (v + m - 1) // m * m


def _vmem_cap_bytes():
    """Generation-aware VMEM ceiling (~80% of per-core capacity).

    v5e/v6e have 128 MiB per core, v7x only 64 MiB; querying the chip instead
    of hard-coding 64 MiB both leaves headroom on v7x and allows bigger tiles
    on v5e/v6e.
    """
    try:
        return int(pltpu.get_tpu_info().vmem_capacity_bytes * 0.8)
    except Exception:
        return int((64 << 20) * 0.8)


def _mlp_layer_kernel(*refs, bn_in, relu_in, matmul, bias, stats_out, relu_out,
                      block_rows, n_rows):
    """One row-block step of one MLP layer.

    Optional stages (selected statically via functools.partial):
      1. bn_in:     training-mode BatchNorm (from the previous layer's
                    accumulated sum/sumsq stats) + optional ReLU, f32 math.
      2. matmul:    y = x @ W on the MXU (bf16 operands, f32 accumulation),
                    optional bias add.
      3. stats_out: accumulate per-feature sum / sum-of-squares of y across the
                    row grid into a VMEM-resident (8, C) output (two-pass BN).
                    Rows beyond n_rows (row padding) are masked out.
      4. relu_out:  ReLU on y (only used on the no-BN path).
    """
    it = iter(refs)
    x_ref = next(it)
    if bn_in:
        stats_in_ref = next(it)
        gamma_ref = next(it)
        beta_ref = next(it)
    w_ref = next(it) if matmul else None
    b_ref = next(it) if bias else None
    y_ref = next(it)
    stats_ref = next(it) if stats_out else None

    x = x_ref[...]
    if bn_in:
        inv_n = 1.0 / n_rows
        mean = stats_in_ref[0:1, :] * inv_n
        var = jnp.maximum(stats_in_ref[1:2, :] * inv_n - mean * mean, 0.0)
        scale = jax.lax.rsqrt(var + BN_EPS) * gamma_ref[...]
        shift = beta_ref[...] - mean * scale
        x = x.astype(jnp.float32) * scale + shift        # f32 epilogue (v5e-safe)
        if relu_in:
            x = jnp.maximum(x, 0.0)

    if matmul:
        # MXU matmul: bf16 operands, f32 accumulation.
        y = jnp.dot(x.astype(w_ref.dtype), w_ref[...],
                    preferred_element_type=jnp.float32)
        if bias:
            y = y + b_ref[...].astype(jnp.float32)
    else:
        y = x.astype(jnp.float32)

    if stats_out:
        i = pl.program_id(0)

        @pl.when(i == 0)
        def _():
            stats_ref[...] = jnp.zeros_like(stats_ref)

        row = i * block_rows + jax.lax.broadcasted_iota(jnp.int32, y.shape, 0)
        ym = jnp.where(row < n_rows, y, 0.0)             # mask padded rows
        stats_ref[0:1, :] += jnp.sum(ym, axis=0, keepdims=True)
        stats_ref[1:2, :] += jnp.sum(ym * ym, axis=0, keepdims=True)

    if relu_out:
        y = jnp.maximum(y, 0.0)
    y_ref[...] = y.astype(y_ref.dtype)


def _run_layer(x_p, *, n_rows, block_rows, out_dtype,
               bn_in=None, relu_in=False, w=None, b=None,
               stats_out=False, relu_out=False):
    """One pallas_call over the row grid for one (partial) MLP layer."""
    n_pad, in_pad = x_p.shape
    matmul = w is not None
    bias = b is not None
    out_pad = w.shape[1] if matmul else in_pad
    grid = (n_pad // block_rows,)

    in_arrays = [x_p]
    in_specs = [pl.BlockSpec((block_rows, in_pad), lambda i: (i, 0))]
    if bn_in is not None:
        stats, gamma, beta = bn_in
        in_arrays += [stats, gamma, beta]
        in_specs += [pl.BlockSpec((STATS_ROWS, in_pad), lambda i: (0, 0)),
                     pl.BlockSpec((1, in_pad), lambda i: (0, 0)),
                     pl.BlockSpec((1, in_pad), lambda i: (0, 0))]
    if matmul:
        in_arrays.append(w)
        in_specs.append(pl.BlockSpec((in_pad, out_pad), lambda i: (0, 0)))
    if bias:
        in_arrays.append(b)
        in_specs.append(pl.BlockSpec((1, out_pad), lambda i: (0, 0)))

    out_shape = [jax.ShapeDtypeStruct((n_pad, out_pad), out_dtype)]
    out_specs = [pl.BlockSpec((block_rows, out_pad), lambda i: (i, 0))]
    if stats_out:
        out_shape.append(jax.ShapeDtypeStruct((STATS_ROWS, out_pad), jnp.float32))
        out_specs.append(pl.BlockSpec((STATS_ROWS, out_pad), lambda i: (0, 0)))

    # VMEM budget: double-buffered row blocks + fully resident small operands.
    nbytes = lambda a: int(a.size) * jnp.dtype(a.dtype).itemsize
    block_bytes = (block_rows * in_pad * jnp.dtype(x_p.dtype).itemsize
                   + block_rows * out_pad * jnp.dtype(out_dtype).itemsize)
    resident_bytes = sum(nbytes(a) for a in in_arrays[1:])
    if stats_out:
        resident_bytes += STATS_ROWS * out_pad * 4
    needed = 2 * block_bytes + 2 * resident_bytes + (1 << 20)
    vmem_limit = int(min(max(2 * needed, 16 << 20), _vmem_cap_bytes()))

    flops = 2 * n_pad * in_pad * out_pad if matmul else 8 * n_pad * out_pad
    bytes_accessed = (nbytes(x_p) + resident_bytes
                      + n_pad * out_pad * jnp.dtype(out_dtype).itemsize
                      + (STATS_ROWS * out_pad * 4 if stats_out else 0))

    kernel = functools.partial(
        _mlp_layer_kernel,
        bn_in=bn_in is not None, relu_in=relu_in, matmul=matmul, bias=bias,
        stats_out=stats_out, relu_out=relu_out,
        block_rows=block_rows, n_rows=n_rows)

    # The stats accumulator is carried across the row grid -> that axis must be
    # "arbitrary"; otherwise it is "parallel" (megacore sharding on v7x).
    semantics = ("arbitrary",) if stats_out else ("parallel",)

    outs = pl.pallas_call(
        kernel,
        grid=grid,
        in_specs=in_specs,
        out_specs=tuple(out_specs),
        out_shape=tuple(out_shape),
        compiler_params=pltpu.CompilerParams(
            dimension_semantics=semantics,
            vmem_limit_bytes=vmem_limit),
        cost_estimate=pl.CostEstimate(
            flops=int(flops),
            transcendentals=int(in_pad if bn_in is not None else 0),
            bytes_accessed=int(bytes_accessed)),
    )(*in_arrays)
    return (outs[0], outs[1]) if stats_out else (outs[0], None)


def init_mlp_params(key, layer_dims):
    """PyTorch-default init.
    Linear: weight, bias ~ U(-1/sqrt(in_dim), 1/sqrt(in_dim))
    BatchNorm1d: gamma = 1, beta = 0
    (Weights stored transposed as (in_dim, out_dim).)
    """
    params = []
    for i in range(len(layer_dims) - 1):
        in_dim, out_dim = layer_dims[i], layer_dims[i + 1]
        key, kw, kb = jax.random.split(key, 3)
        bound = 1.0 / (in_dim ** 0.5)
        w = jax.random.uniform(kw, (in_dim, out_dim), jnp.float32, -bound, bound)
        b = jax.random.uniform(kb, (out_dim,), jnp.float32, -bound, bound)
        gamma = jnp.ones((out_dim,), jnp.float32)
        beta = jnp.zeros((out_dim,), jnp.float32)
        params.append((w, b, gamma, beta))
    return params


def prepare_mlp_params(params, *, batch_norm=True, compute_dtype=jnp.bfloat16):
    """Pad feature dims to LANE multiples ONCE and cast weights to the MXU
    compute dtype (bf16).  Done at init so no per-forward jnp.pad of weights.

    When batch_norm=True the Linear bias is dropped: it is exactly cancelled by
    the BN mean subtraction.  Padded gamma/beta are zero so padded feature
    columns stay exactly zero through every layer.
    """
    prepared = []
    for (w, b, gamma, beta) in params:
        in_dim, out_dim = w.shape
        ip, op = _round_up(in_dim, LANE), _round_up(out_dim, LANE)
        entry = {
            "w": jnp.pad(w, ((0, ip - in_dim), (0, op - out_dim))).astype(compute_dtype),
            "in_dim": in_dim, "out_dim": out_dim,
        }
        if batch_norm:
            entry["gamma"] = jnp.pad(gamma.reshape(1, -1), ((0, 0), (0, op - out_dim)))
            entry["beta"] = jnp.pad(beta.reshape(1, -1), ((0, 0), (0, op - out_dim)))
        else:
            entry["b"] = jnp.pad(b.reshape(1, -1), ((0, 0), (0, op - out_dim)))
        prepared.append(entry)
    return prepared


def mlp_forward(x, prepared, *, batch_norm=True, relu=True,
                compute_dtype=jnp.bfloat16, block_rows=256):
    """Forward of MLP(layer_dims) using pre-padded params from prepare_mlp_params.

    BN path (training-mode BN, batch mean / biased batch variance) runs two
    passes per layer over the row grid; pass l+1's BN-apply is fused with
    layer l+1's matmul so each intermediate activation crosses HBM once (bf16).
    """
    n, in_dim = x.shape
    n_layers = len(prepared)
    assert in_dim == prepared[0]["in_dim"]
    assert ("gamma" in prepared[0]) == batch_norm, "prepare/forward batch_norm mismatch"

    block_rows = _round_up(max(16, min(block_rows, _round_up(n, 16))), 16)
    n_pad = _round_up(n, block_rows)
    in_pad = prepared[0]["w"].shape[0]
    x_p = jnp.pad(x, ((0, n_pad - n), (0, in_pad - in_dim))).astype(compute_dtype)

    if not batch_norm:
        y = x_p
        for li, p in enumerate(prepared):
            last = li == n_layers - 1
            y, _ = _run_layer(
                y, n_rows=n, block_rows=block_rows,
                w=p["w"], b=p["b"], relu_out=relu,
                out_dtype=jnp.float32 if last else compute_dtype)
        return y[:n, :prepared[-1]["out_dim"]]

    # Layer 0: matmul + stats of its pre-BN output.
    y, stats = _run_layer(x_p, n_rows=n, block_rows=block_rows,
                          w=prepared[0]["w"], stats_out=True,
                          out_dtype=compute_dtype)
    # Middle layers: BN+ReLU of layer l-1 fused with layer l's matmul + stats.
    for li in range(1, n_layers):
        y, stats = _run_layer(
            y, n_rows=n, block_rows=block_rows,
            bn_in=(stats, prepared[li - 1]["gamma"], prepared[li - 1]["beta"]),
            relu_in=relu,
            w=prepared[li]["w"], stats_out=True,
            out_dtype=compute_dtype)
    # Finalize: BN+ReLU of the last layer's pre-BN output.
    out, _ = _run_layer(
        y, n_rows=n, block_rows=block_rows,
        bn_in=(stats, prepared[-1]["gamma"], prepared[-1]["beta"]),
        relu_in=relu,
        out_dtype=jnp.float32)
    return out[:n, :prepared[-1]["out_dim"]]


def mlp_reference(x, params, *, batch_norm=True, relu=True,
                  compute_dtype=jnp.float32):
    """Pure-JAX reference of the PyTorch forward (training-mode BN, with bias).

    compute_dtype=bf16 models the MXU operand precision used by the kernel
    (f32 accumulation either way); compute_dtype=f32 is the exact module math.
    """
    for (w, b, gamma, beta) in params:
        y = jnp.dot(x.astype(compute_dtype), w.astype(compute_dtype),
                    preferred_element_type=jnp.float32) + b
        if batch_norm:
            mean = jnp.mean(y, axis=0, keepdims=True)
            var = jnp.mean((y - mean) ** 2, axis=0, keepdims=True)  # biased
            y = (y - mean) * jax.lax.rsqrt(var + BN_EPS) * gamma + beta
        if relu:
            y = jnp.maximum(y, 0.0)
        x = y
    return x


if __name__ == "__main__":
    # Small DGCNN-style shapes:
    #   feature MLP([48, 128, 64]) with BN+ReLU over N=500 points (N is
    #   deliberately NOT a multiple of the row block, exercising padded-row
    #   masking in the BN stats), then a classifier Linear(64 -> 10) like
    #   DGCNN's final nn.Linear (batch_norm=False, relu=False).
    layer_dims = [48, 128, 64]
    num_classes = 10
    n_points = 500

    key = jax.random.PRNGKey(0)
    key, kx, kp, kc = jax.random.split(key, 4)
    x = jax.random.normal(kx, (n_points, layer_dims[0]), jnp.float32)
    params = init_mlp_params(kp, layer_dims)
    cls_params = init_mlp_params(kc, [layer_dims[-1], num_classes])

    # Pad / cast parameters ONCE (not inside the per-step forward).
    prep = prepare_mlp_params(params, batch_norm=True)
    cls_prep = prepare_mlp_params(cls_params, batch_norm=False)

    # Feature MLP: 2x (Linear -> BN(train) -> ReLU), row-gridded, two-pass BN.
    feats = jax.block_until_ready(mlp_forward(x, prep, batch_norm=True, relu=True))
    assert feats.shape == (n_points, layer_dims[-1])

    # Reference 1: same bf16 MXU operand precision as the kernel (tight check).
    ref_bf16 = mlp_reference(x, params, batch_norm=True, relu=True,
                             compute_dtype=jnp.bfloat16)
    err = float(jnp.max(jnp.abs(feats - ref_bf16)))
    assert err < 5e-2, f"feature MLP vs bf16-matched reference: {err}"
    # Reference 2: exact f32 module semantics (looser check: bf16 MXU compute).
    ref_f32 = mlp_reference(x, params, batch_norm=True, relu=True)
    err = float(jnp.max(jnp.abs(feats - ref_f32)))
    assert err < 1.5e-1, f"feature MLP vs f32 module reference: {err}"

    # Classifier head: plain Linear (bias kept), fully "parallel" row grid.
    logits = jax.block_until_ready(
        mlp_forward(feats, cls_prep, batch_norm=False, relu=False))
    assert logits.shape == (n_points, num_classes)
    ref_logits_bf16 = mlp_reference(ref_bf16, cls_params, batch_norm=False,
                                    relu=False, compute_dtype=jnp.bfloat16)
    err = float(jnp.max(jnp.abs(logits - ref_logits_bf16)))
    assert err < 5e-2, f"classifier vs bf16-matched reference: {err}"
    ref_logits_f32 = mlp_reference(ref_f32, cls_params, batch_norm=False, relu=False)
    err = float(jnp.max(jnp.abs(logits - ref_logits_f32)))
    assert err < 1.5e-1, f"classifier vs f32 module reference: {err}"

    print("KERNEL_OK")
</pallas_src>

<mosaic_0001>
module attributes {stable_mosaic.version = 11 : i64} {
  func.func @_mlp_layer_kernel(%arg0: i32, %arg1: memref<256x128xbf16, #tpu.memory_space<vmem>>, %arg2: memref<128x128xbf16, #tpu.memory_space<vmem>>, %arg3: memref<256x128xbf16, #tpu.memory_space<vmem>>, %arg4: memref<8x128xf32, #tpu.memory_space<vmem>>) attributes {dimension_semantics = [#tpu.dimension_semantics<arbitrary>], iteration_bounds = array<i64: 2>, scalar_prefetch = 0 : i64, scratch_operands = 0 : i64, tpu.core_type = #tpu.core_type<tc>, window_params = [{transform_indices = @transform_0, window_bounds = array<i64: 256, 128>}, {pipeline_mode = #tpu.pipeline_mode<synchronous>, transform_indices = @transform_1, window_bounds = array<i64: 128, 128>}, {transform_indices = @transform_2, window_bounds = array<i64: 256, 128>}, {pipeline_mode = #tpu.pipeline_mode<synchronous>, transform_indices = @transform_3, window_bounds = array<i64: 8, 128>}]} {
    %c0 = arith.constant 0 : index
    %c0_0 = arith.constant 0 : index
    %0 = vector.load %arg1[%c0, %c0_0] : memref<256x128xbf16, #tpu.memory_space<vmem>>, vector<256x128xbf16>
    %c0_1 = arith.constant 0 : index
    %c0_2 = arith.constant 0 : index
    %1 = vector.load %arg2[%c0_1, %c0_2] : memref<128x128xbf16, #tpu.memory_space<vmem>>, vector<128x128xbf16>
    %cst = arith.constant dense<0.000000e+00> : vector<256x128xf32>
    %2 = tpu.matmul %0, %1, %cst {dimension_numbers = #tpu.dot_dimension_numbers<[1], [0], [0], [1], [0, 0, 1, 1], [], []>} : vector<256x128xbf16>, vector<128x128xbf16>, vector<256x128xf32> -> vector<256x128xf32>
    %c0_i32 = arith.constant 0 : i32
    %3 = arith.cmpi eq, %arg0, %c0_i32 : i32
    %4 = arith.extui %3 : i1 to i32
    %c0_i32_3 = arith.constant 0 : i32
    %5 = arith.cmpi ne, %4, %c0_i32_3 : i32
    scf.if %5 {
      %cst_16 = arith.constant 0.000000e+00 : f32
      %27 = vector.broadcast %cst_16 : f32 to vector<8x128xf32>
      %c0_17 = arith.constant 0 : index
      %c0_18 = arith.constant 0 : index
      %28 = vector.load %arg4[%c0_17, %c0_18] : memref<8x128xf32, #tpu.memory_space<vmem>>, vector<8x128xf32>
      tpu.vector_store %arg4[%c0_17, %c0_18], %27 {strides = array<i32>} : memref<8x128xf32, #tpu.memory_space<vmem>>, vector<8x128xf32>,
    } else {
    }
    %c256_i32 = arith.constant 256 : i32
    %6 = arith.muli %arg0, %c256_i32 : i32
    %7 = tpu.iota {dimensions = array<i32: 0>} : vector<256x128xi32>
    %8 = vector.broadcast %6 : i32 to vector<256x128xi32>
    %9 = arith.addi %8, %7 : vector<256x128xi32>
    %c500_i32 = arith.constant 500 : i32
    %10 = vector.broadcast %c500_i32 : i32 to vector<256x128xi32>
    %11 = arith.cmpi slt, %9, %10 : vector<256x128xi32>
    %cst_4 = arith.constant 0.000000e+00 : f32
    %12 = vector.broadcast %cst_4 : f32 to vector<256x128xf32>
    %13 = arith.select %11, %2, %12 : vector<256x128xi1>, vector<256x128xf32>
    %c0_5 = arith.constant 0 : index
    %c0_6 = arith.constant 0 : index
    %14 = vector.load %arg4[%c0_5, %c0_6] : memref<8x128xf32, #tpu.memory_space<vmem>>, vector<1x128xf32>
    %cst_7 = arith.constant dense<0.000000e+00> : vector<128xf32>
    %15 = vector.multi_reduction <add>, %13, %cst_7 [0] : vector<256x128xf32> to vector<128xf32>
    %16 = vector.shape_cast %15 : vector<128xf32> to vector<1x128xf32>
    %17 = arith.addf %14, %16 : vector<1x128xf32>
    %c0_8 = arith.constant 0 : index
    %c0_9 = arith.constant 0 : index
    %18 = vector.load %arg4[%c0_8, %c0_9] : memref<8x128xf32, #tpu.memory_space<vmem>>, vector<1x128xf32>
    tpu.vector_store %arg4[%c0_8, %c0_9], %17 {strides = array<i32>} : memref<8x128xf32, #tpu.memory_space<vmem>>, vector<1x128xf32>,
    %c1 = arith.constant 1 : index
    %c0_10 = arith.constant 0 : index
    %19 = vector.load %arg4[%c1, %c0_10] : memref<8x128xf32, #tpu.memory_space<vmem>>, vector<1x128xf32>
    %20 = arith.mulf %13, %13 : vector<256x128xf32>
    %cst_11 = arith.constant dense<0.000000e+00> : vector<128xf32>
    %21 = vector.multi_reduction <add>, %20, %cst_11 [0] : vector<256x128xf32> to vector<128xf32>
    %22 = vector.shape_cast %21 : vector<128xf32> to vector<1x128xf32>
    %23 = arith.addf %19, %22 : vector<1x128xf32>
    %c1_12 = arith.constant 1 : index
    %c0_13 = arith.constant 0 : index
    %24 = vector.load %arg4[%c1_12, %c0_13] : memref<8x128xf32, #tpu.memory_space<vmem>>, vector<1x128xf32>
    tpu.vector_store %arg4[%c1_12, %c0_13], %23 {strides = array<i32>} : memref<8x128xf32, #tpu.memory_space<vmem>>, vector<1x128xf32>,
    %25 = arith.truncf %2 : vector<256x128xf32> to vector<256x128xbf16>
    %c0_14 = arith.constant 0 : index
    %c0_15 = arith.constant 0 : index
    %26 = vector.load %arg3[%c0_14, %c0_15] : memref<256x128xbf16, #tpu.memory_space<vmem>>, vector<256x128xbf16>
    tpu.vector_store %arg3[%c0_14, %c0_15], %25 {strides = array<i32>} : memref<256x128xbf16, #tpu.memory_space<vmem>>, vector<256x128xbf16>,
    return
  }
  func.func @transform_0(%arg0: i32) -> (i32, i32) {
    %c0_i32 = arith.constant 0 : i32
    %c0_i32_0 = arith.constant 0 : i32
    return %arg0, %c0_i32 : i32, i32
  }
  func.func @transform_1(%arg0: i32) -> (i32, i32) {
    %c0_i32 = arith.constant 0 : i32
    %c0_i32_0 = arith.constant 0 : i32
    %c0_i32_1 = arith.constant 0 : i32
    return %c0_i32, %c0_i32_0 : i32, i32
  }
  func.func @transform_2(%arg0: i32) -> (i32, i32) {
    %c0_i32 = arith.constant 0 : i32
    %c0_i32_0 = arith.constant 0 : i32
    return %arg0, %c0_i32 : i32, i32
  }
  func.func @transform_3(%arg0: i32) -> (i32, i32) {
    %c0_i32 = arith.constant 0 : i32
    %c0_i32_0 = arith.constant 0 : i32
    %c0_i32_1 = arith.constant 0 : i32
    return %c0_i32, %c0_i32_0 : i32, i32
  }
}

</mosaic_0001>

<llo_original>
// kernel: tpu_custom_call.1
$region0: #{tpu_custom_call.1}
  #allocation0 [shape = 'u32[]', space=smem, size = 0x4, offset = 0x4, fixed_abs, tag = 'smem constant byte address 0x4 - core index']
  #allocation1 [shape = 'u32[144,128]{1,0:T(1,128)}', space=vmem, size = 0x12000, scoped, tag = 'internal scratch']
  %s0 = inlined_call_operand.hbm [shape: bf16[512,128], index: 0, kind: input, shape index: {}]
  %s1 = inlined_call_operand.hbm [shape: bf16[128,128], index: 1, kind: input, shape index: {}]
  %s2 = inlined_call_operand.hbm [shape: bf16[512,128], index: 2, kind: output, shape index: {0}]
  %s3 = inlined_call_operand.hbm [shape: f32[8,128], index: 3, kind: output, shape index: {1}]
  %4 = xla_tuple %s2, %s3
  %s5 = sld [smem:[#allocation0]]
  $region61: #{tpu_custom_call.1} parent=0
    _
  %s7 = ssub.s32 1, %s5
  %s8 = scalar_select 0, %s7, %s5
  $region1: #{tpu_custom_call.1} parent=0
    #allocation2 [shape = 'u8[131072]{0}', space=vmem, size = 0x20000, scoped, tag = 'input window, operand 0']
    #allocation3 [shape = 's32[2]{0}', space=sflag, size = 0x8, scoped, tag = 'scoped memory for tpu_custom_call.1']
    #allocation4 [shape = 's32[2]{0}', space=sflag, size = 0x8, scoped, tag = 'scoped memory for tpu_custom_call.1']
    #allocation5 [shape = 'u8[32768]{0}', space=vmem, size = 0x8000, scoped, tag = 'input window, operand 1, single buffered']
    #allocation6 [shape = 's32[1]{0}', space=sflag, size = 0x4, scoped, tag = 'scoped memory for tpu_custom_call.1']
    #allocation7 [shape = 'u8[131072]{0}', space=vmem, size = 0x20000, scoped, tag = 'output window, operand 0']
    #allocation8 [shape = 'u8[4096]{0}', space=vmem, size = 0x1000, scoped, tag = 'output window, operand 1, single buffered']
    #allocation9 [shape = 's32[1]{0}', space=sflag, size = 0x4, scoped, tag = 'scoped memory for tpu_custom_call.1']
    %9 = vsyncpa [#allocation3], 0
    %s10 = scalar_lea.sflag [#allocation3], 1
    %11 = vsyncpa %s10, 0
    %12 = vsyncpa [#allocation6], 0
    %13 = vsyncpa [#allocation4], 0
    %s14 = scalar_lea.sflag [#allocation4], 1
    %15 = vsyncpa %s14, 0
    %16 = vsyncpa [#allocation9], 0
    loop: start=0, step=1, limit=4
    $region2: #{tpu_custom_call.1} parent=1 // loop_pre_header
      _
    $region3: #{tpu_custom_call.1} parent=1 // loop_header
      %s18 = sphi 0, %s22
      %p19 = scmp.ge.s32.totalorder %s18, 4
      %s28 = sphi 0, %s30
      %s31 = sphi 0, %s28
      %s32 = sphi 0, %s31
      %s48 = sphi 0, %s32
      %s52 = sphi 0, %s52
      %s54 = sphi 0, %s52
      %s55 = sphi 0, %s54
      %s69 = sphi 0, %s55
      %s75 = sphi 0, %s77
      %s78 = sphi 0, %s75
      %s79 = sphi 0, %s78
      %s95 = sphi 0, %s79
      %s99 = sphi 0, %s99
      %s101 = sphi 0, %s99
      %s102 = sphi 0, %s101
      %s116 = sphi 0, %s102
    $region4: #{tpu_custom_call.1} parent=1 // loop_header_branch
      %21 = sbr.rel (%p19) target = $region8
    $region5: #{tpu_custom_call.1} parent=1 // loop_body
      %s23 = ssub.s32 %s18, 1
      %s24 = ssub.s32 %s18, 2
      %s25 = sadd.s32 %s18, 1
      %s26 = ssub.s32 %s18, %s25
      %p27 = scmp.eq.s32.totalorder %s26, 0
      %s29 = sadd.s32 %s28, 1
      %s30 = scalar_select %p27, %s28, %s29
      %p33 = pneg %p27
      %p34 = scmp.eq.s32.totalorder %s18, 1
      %p35 = por %p33, %p34
      %p36 = scmp.ne.s32.totalorder %s28, %s31
      %p37 = scmp.eq.s32.totalorder %s18, 0
      %p38 = por %p36, %p37
      %p39 = scmp.ne.s32.totalorder %s28, %s31
      %p40 = scmp.eq.s32.totalorder %s23, 1
      %p41 = por %p39, %p40
      %p42 = scmp.ne.s32.totalorder %s31, %s32
      %p43 = scmp.eq.s32.totalorder %s23, 0
      %p44 = por %p42, %p43
      %p45 = scmp.ne.s32.totalorder %s31, %s32
      %p46 = scmp.eq.s32.totalorder %s24, 1
      %p47 = por %p45, %p46
      %p49 = scmp.ne.s32.totalorder %s32, %s48
      %p50 = scmp.eq.s32.totalorder %s24, 0
      %p51 = por %p49, %p50
      %s53 = sadd.s32 %s52, 1
      %p56 = scmp.eq.s32.totalorder %s18, 1
      %p57 = scmp.ne.s32.totalorder %s52, %s54
      %p58 = scmp.eq.s32.totalorder %s18, 0
      %p59 = por %p57, %p58
      %p60 = scmp.ne.s32.totalorder %s52, %s54
      %p61 = scmp.eq.s32.totalorder %s23, 1
      %p62 = por %p60, %p61
      %p63 = scmp.ne.s32.totalorder %s54, %s55
      %p64 = scmp.eq.s32.totalorder %s23, 0
      %p65 = por %p63, %p64
      %p66 = scmp.ne.s32.totalorder %s54, %s55
      %p67 = scmp.eq.s32.totalorder %s24, 1
      %p68 = por %p66, %p67
      %p70 = scmp.ne.s32.totalorder %s55, %s69
      %p71 = scmp.eq.s32.totalorder %s24, 0
      %p72 = por %p70, %p71
      %s73 = ssub.s32 %s18, %s25
      %p74 = scmp.eq.s32.totalorder %s73, 0
      %s76 = sadd.s32 %s75, 1
      %s77 = scalar_select %p74, %s75, %s76
      %p80 = pneg %p74
      %p81 = scmp.eq.s32.totalorder %s18, 1
      %p82 = por %p80, %p81
      %p83 = scmp.ne.s32.totalorder %s75, %s78
      %p84 = scmp.eq.s32.totalorder %s18, 0
      %p85 = por %p83, %p84
      %p86 = scmp.ne.s32.totalorder %s75, %s78
      %p87 = scmp.eq.s32.totalorder %s23, 1
      %p88 = por %p86, %p87
      %p89 = scmp.ne.s32.totalorder %s78, %s79
      %p90 = scmp.eq.s32.totalorder %s23, 0
      %p91 = por %p89, %p90
      %p92 = scmp.ne.s32.totalorder %s78, %s79
      %p93 = scmp.eq.s32.totalorder %s24, 1
      %p94 = por %p92, %p93
      %p96 = scmp.ne.s32.totalorder %s79, %s95
      %p97 = scmp.eq.s32.totalorder %s24, 0
      %p98 = por %p96, %p97
      %s100 = sadd.s32 %s99, 1
      %p103 = scmp.eq.s32.totalorder %s18, 1
      %p104 = scmp.ne.s32.totalorder %s99, %s101
      %p105 = scmp.eq.s32.totalorder %s18, 0
      %p106 = por %p104, %p105
      %p107 = scmp.ne.s32.totalorder %s99, %s101
      %p108 = scmp.eq.s32.totalorder %s23, 1
      %p109 = por %p107, %p108
      %p110 = scmp.ne.s32.totalorder %s101, %s102
      %p111 = scmp.eq.s32.totalorder %s23, 0
      %p112 = por %p110, %p111
      %p113 = scmp.ne.s32.totalorder %s101, %s102
      %p114 = scmp.eq.s32.totalorder %s24, 1
      %p115 = por %p113, %p114
      %p117 = scmp.ne.s32.totalorder %s102, %s116
      %p118 = scmp.eq.s32.totalorder %s24, 0
      %p119 = por %p117, %p118
      %p120 = scmp.le.s32.totalorder 1, %s18
      %p121 = scmp.lt.s32.totalorder %s18, 3
      %p122 = pnand %p120, %p121
      %p123 = pneg %p122
      // Predicated region
      $region9: #{tpu_custom_call.1} parent=5 // pred_check
        _
      $region10: #{tpu_custom_call.1} parent=5 // pred_check_branch
        %125 = sbr.rel (%p122) target = $region12
      $region11: #{tpu_custom_call.1} parent=5 // pred_region
        %s126 = ssub.s32 %s18, 1
        // Predicated region
        $region13: #{tpu_custom_call.1} parent=11 // pred_check
          %p127 = pneg %p65
        $region14: #{tpu_custom_call.1} parent=11 // pred_check_branch
          %129 = sbr.rel (%p127) target = $region16
        $region15: #{tpu_custom_call.1} parent=11 // pred_region
          %s131 = ssub.s32 1024, 1024
          %132 = vsyncadd [#allocation6], %s131
          %s133 = sshll.u32 [#allocation5], 4
          %s134 = int_to_ptr.vmem [resolvable:$true] %s133
          %139 = dma.hbm_to_vmem [thread:$0]  %s1, 1024, %s134, [#allocation6], 64, 64, 4
        $region16: #{tpu_custom_call.1} parent=11 // pred_fallthru
          _
      $region12: #{tpu_custom_call.1} parent=5 // pred_fallthru
        _
      %p140 = scmp.lt.s32.totalorder %s18, 2
      // Predicated region
      $region17: #{tpu_custom_call.1} parent=5 // pred_check
        %p141 = pneg %p140
      $region18: #{tpu_custom_call.1} parent=5 // pred_check_branch
        %143 = sbr.rel (%p141) target = $region20
      $region19: #{tpu_custom_call.1} parent=5 // pred_region
        // Predicated region
        $region21: #{tpu_custom_call.1} parent=19 // pred_check
          %p144 = pneg %p38
        $region22: #{tpu_custom_call.1} parent=19 // pred_check_branch
          %146 = sbr.rel (%p144) target = $region24
        $region23: #{tpu_custom_call.1} parent=19 // pred_region
          %s147 = sand.u32 %s28, 1
          %s148 = scalar_lea.sflag [#allocation3], %s147
          %s149 = sand.u32 %s28, 1
          %s150 = smul.addr %s149, 128
          %s151 = scalar_lea.vmem [#allocation2], %s150
          %s152 = smul.u32 32, %s18
          %s154 = ssub.s32 2048, 2048
          %155 = vsyncadd %s148, %s154
          %s156 = smul.addr %s152, 64
          %s157 = scalar_lea.hbm %s0, %s156
          %s158 = sshll.u32 %s151, 4
          %s159 = int_to_ptr.vmem [resolvable:$true] %s158
          %164 = dma.hbm_to_vmem [thread:$0]  %s157, 2048, %s159, %s148, 64, 64, 4
        $region24: #{tpu_custom_call.1} parent=19 // pred_fallthru
          _
      $region20: #{tpu_custom_call.1} parent=5 // pred_fallthru
        _
      %p165 = scmp.le.s32.totalorder 1, %s18
      %p166 = scmp.lt.s32.totalorder %s18, 3
      %p167 = pnand %p165, %p166
      %p168 = pneg %p167
      // Predicated region
      $region25: #{tpu_custom_call.1} parent=5 // pred_check
        _
      $region26: #{tpu_custom_call.1} parent=5 // pred_check_branch
        %170 = sbr.rel (%p167) target = $region28
      $region27: #{tpu_custom_call.1} parent=5 // pred_region
        %s171 = ssub.s32 %s18, 1
        %s172 = sand.u32 %s31, 1
        %s173 = scalar_lea.sflag [#allocation3], %s172
        %s174 = sand.u32 %s31, 1
        %s175 = smul.addr %s174, 128
        %s176 = scalar_lea.vmem [#allocation2], %s175
        // Predicated region
        $region29: #{tpu_custom_call.1} parent=27 // pred_check
          %p177 = pneg %p44
        $region30: #{tpu_custom_call.1} parent=27 // pred_check_branch
          %179 = sbr.rel (%p177) target = $region32
        $region31: #{tpu_custom_call.1} parent=27 // pred_region
          %180 = dma.done %s173, 2048
        $region32: #{tpu_custom_call.1} parent=27 // pred_fallthru
          _
        // Predicated region
        $region33: #{tpu_custom_call.1} parent=27 // pred_check
          %p181 = pneg %p65
        $region34: #{tpu_custom_call.1} parent=27 // pred_check_branch
          %183 = sbr.rel (%p181) target = $region36
        $region35: #{tpu_custom_call.1} parent=27 // pred_region
          %184 = dma.done [#allocation6], 1024
        $region36: #{tpu_custom_call.1} parent=27 // pred_fallthru
          _
        %s185 = sand.u32 %s31, 1
        %s186 = scalar_lea.sflag [#allocation3], %s185
        %s187 = sand.u32 %s31, 1
        %s188 = smul.addr %s187, 128
        %s189 = scalar_lea.vmem [#allocation2], %s188
        %p190 = pneg %p44
        %p191 = pneg %p41
        %p192 = pneg %p65
        %p193 = pneg %p62
        %p194 = pneg %p91
        %p195 = pneg %p88
        %s196 = sand.u32 %s78, 1
        %s197 = scalar_lea.sflag [#allocation4], %s196
        %s198 = sand.u32 %s78, 1
        %s199 = smul.addr %s198, 128
        %s200 = scalar_lea.vmem [#allocation7], %s199
        %p201 = pneg %p112
        %p202 = pneg %p109
        %s203 = smul.u32 32, %s23
        %s204 = smul.u32 32, %s23
        %v206 = vld [vmem:[%s176] sm:$0xf]
        %v207 = vld [vmem:[%s176 + $0x4] sm:$0xf]
        %v208 = vld [vmem:[%s176 + $0x8] sm:$0xf]
        %v209 = vld [vmem:[%s176 + $0xc] sm:$0xf]
        %v210 = vld [vmem:[%s176 + $0x10] sm:$0xf]
        %v211 = vld [vmem:[%s176 + $0x14] sm:$0xf]
        %v212 = vld [vmem:[%s176 + $0x18] sm:$0xf]
        %v213 = vld [vmem:[%s176 + $0x1c] sm:$0xf]
        %v214 = vld [vmem:[%s176 + $0x20] sm:$0xf]
        %v215 = vld [vmem:[%s176 + $0x24] sm:$0xf]
        %v216 = vld [vmem:[%s176 + $0x28] sm:$0xf]
        %v217 = vld [vmem:[%s176 + $0x2c] sm:$0xf]
        %v218 = vld [vmem:[%s176 + $0x30] sm:$0xf]
        %v219 = vld [vmem:[%s176 + $0x34] sm:$0xf]
        %v220 = vld [vmem:[%s176 + $0x38] sm:$0xf]
        %v221 = vld [vmem:[%s176 + $0x3c] sm:$0xf]
        %v222 = vld [vmem:[%s176 + $0x40] sm:$0xf]
        %v223 = vld [vmem:[%s176 + $0x44] sm:$0xf]
        %v224 = vld [vmem:[%s176 + $0x48] sm:$0xf]
        %v225 = vld [vmem:[%s176 + $0x4c] sm:$0xf]
        %v226 = vld [vmem:[%s176 + $0x50] sm:$0xf]
        %v227 = vld [vmem:[%s176 + $0x54] sm:$0xf]
        %v228 = vld [vmem:[%s176 + $0x58] sm:$0xf]
        %v229 = vld [vmem:[%s176 + $0x5c] sm:$0xf]
        %v230 = vld [vmem:[%s176 + $0x60] sm:$0xf]
        %v231 = vld [vmem:[%s176 + $0x64] sm:$0xf]
        %v232 = vld [vmem:[%s176 + $0x68] sm:$0xf]
        %v233 = vld [vmem:[%s176 + $0x6c] sm:$0xf]
        %v234 = vld [vmem:[%s176 + $0x70] sm:$0xf]
        %v235 = vld [vmem:[%s176 + $0x74] sm:$0xf]
        %v236 = vld [vmem:[%s176 + $0x78] sm:$0xf]
        %v237 = vld [vmem:[%s176 + $0x7c] sm:$0xf]
        %v238 = vld [vmem:[#allocation5] sm:$0xf]
        %v239 = vld [vmem:[#allocation5 + $0x4] sm:$0xf]
        %v240 = vld [vmem:[#allocation5 + $0x8] sm:$0xf]
        %v241 = vld [vmem:[#allocation5 + $0xc] sm:$0xf]
        %v242 = vld [vmem:[#allocation5 + $0x10] sm:$0xf]
        %v243 = vld [vmem:[#allocation5 + $0x14] sm:$0xf]
        %v244 = vld [vmem:[#allocation5 + $0x18] sm:$0xf]
        %v245 = vld [vmem:[#allocation5 + $0x1c] sm:$0xf]
        %v246 = vld [vmem:[#allocation5 + $0x20] sm:$0xf]
        %v247 = vld [vmem:[#allocation5 + $0x24] sm:$0xf]
        %v248 = vld [vmem:[#allocation5 + $0x28] sm:$0xf]
        %v249 = vld [vmem:[#allocation5 + $0x2c] sm:$0xf]
        %v250 = vld [vmem:[#allocation5 + $0x30] sm:$0xf]
        %v251 = vld [vmem:[#allocation5 + $0x34] sm:$0xf]
        %v252 = vld [vmem:[#allocation5 + $0x38] sm:$0xf]
        %v253 = vld [vmem:[#allocation5 + $0x3c] sm:$0xf]
        %v286 = vunpack.c.l.b16 %v206
        %v287 = vunpack.c.l.b16 %v207
        %v288 = vunpack.c.l.b16 %v208
        %v289 = vunpack.c.l.b16 %v209
        %v290 = vunpack.c.l.b16 %v210
        %v291 = vunpack.c.l.b16 %v211
        %v292 = vunpack.c.l.b16 %v212
        %v293 = vunpack.c.l.b16 %v213
        %v294 = vunpack.c.l.b16 %v214
        %v295 = vunpack.c.l.b16 %v215
        %v296 = vunpack.c.l.b16 %v216
        %v297 = vunpack.c.l.b16 %v217
        %v298 = vunpack.c.l.b16 %v218
        %v299 = vunpack.c.l.b16 %v219
        %v300 = vunpack.c.l.b16 %v220
        %v301 = vunpack.c.l.b16 %v221
        %v302 = vunpack.c.l.b16 %v222
        %v303 = vunpack.c.l.b16 %v223
        %v304 = vunpack.c.l.b16 %v224
        %v305 = vunpack.c.l.b16 %v225
        %v306 = vunpack.c.l.b16 %v226
        %v307 = vunpack.c.l.b16 %v227
        %v308 = vunpack.c.l.b16 %v228
        %v309 = vunpack.c.l.b16 %v229
        %v310 = vunpack.c.l.b16 %v230
        %v311 = vunpack.c.l.b16 %v231
        %v312 = vunpack.c.l.b16 %v232
        %v313 = vunpack.c.l.b16 %v233
        %v314 = vunpack.c.l.b16 %v234
        %v315 = vunpack.c.l.b16 %v235
        %v316 = vunpack.c.l.b16 %v236
        %v317 = vunpack.c.l.b16 %v237
        %v318 = vpack.c.b16 %v287, %v286
        %v319 = vpack.c.b16 %v289, %v288
        %v320 = vpack.c.b16 %v291, %v290
        %v321 = vpack.c.b16 %v293, %v292
        %v322 = vpack.c.b16 %v295, %v294
        %v323 = vpack.c.b16 %v297, %v296
        %v324 = vpack.c.b16 %v299, %v298
        %v325 = vpack.c.b16 %v301, %v300
        %v326 = vpack.c.b16 %v303, %v302
        %v327 = vpack.c.b16 %v305, %v304
        %v328 = vpack.c.b16 %v307, %v306
        %v329 = vpack.c.b16 %v309, %v308
        %v330 = vpack.c.b16 %v311, %v310
        %v331 = vpack.c.b16 %v313, %v312
        %v332 = vpack.c.b16 %v315, %v314
        %v333 = vpack.c.b16 %v317, %v316
        %v366 = vunpack.c.l.b16 %v238
        %v367 = vunpack.c.l.b16 %v239
        %v368 = vunpack.c.l.b16 %v240
        %v369 = vunpack.c.l.b16 %v241
        %v370 = vunpack.c.l.b16 %v242
        %v371 = vunpack.c.l.b16 %v243
        %v372 = vunpack.c.l.b16 %v244
        %v373 = vunpack.c.l.b16 %v245
        %v374 = vunpack.c.l.b16 %v246
        %v375 = vunpack.c.l.b16 %v247
        %v376 = vunpack.c.l.b16 %v248
        %v377 = vunpack.c.l.b16 %v249
        %v378 = vunpack.c.l.b16 %v250
        %v379 = vunpack.c.l.b16 %v251
        %v380 = vunpack.c.l.b16 %v252
        %v381 = vunpack.c.l.b16 %v253
        %v382 = vpack.c.b16 %v367, %v366
        %v383 = vpack.c.b16 %v369, %v368
        %v384 = vpack.c.b16 %v371, %v370
        %v385 = vpack.c.b16 %v373, %v372
        %v386 = vpack.c.b16 %v375, %v374
        %v387 = vpack.c.b16 %v377, %v376
        %v388 = vpack.c.b16 %v379, %v378
        %v389 = vpack.c.b16 %v381, %v380
        %398 = vmatprep.subr.bf16.mxu0 0
        %399 = vmatpush1.bf16.msra.mxu0 %v382
        %400 = vmatprep.subr.bf16.mxu0 0
        %401 = vmatpush1.bf16.msra.mxu0 %v383
        %402 = vmatprep.subr.bf16.mxu0 0
        %403 = vmatpush1.bf16.msra.mxu0 %v384
        %404 = vmatprep.subr.bf16.mxu0 0
        %405 = vmatpush1.bf16.msra.mxu0 %v385
        %406 = vmatprep.subr.bf16.mxu0 0
        %407 = vmatpush1.bf16.msra.mxu0 %v386
        %408 = vmatprep.subr.bf16.mxu0 0
        %409 = vmatpush1.bf16.msra.mxu0 %v387
        %410 = vmatprep.subr.bf16.mxu0 0
        %411 = vmatpush1.bf16.msra.mxu0 %v388
        %412 = vmatprep.subr.bf16.mxu0 0
        %413 = vmatpush1.bf16.msra.mxu0 %v389
        %414 = vmatprep.subr.bf16.mxu0 0
        %415 = vmatpush1.bf16.msra.mxu0 0
        %416 = vmatprep.subr.bf16.mxu0 0
        %417 = vmatpush1.bf16.msra.mxu0 0
        %418 = vmatprep.subr.bf16.mxu0 0
        %419 = vmatpush1.bf16.msra.mxu0 0
        %420 = vmatprep.subr.bf16.mxu0 0
        %421 = vmatpush1.bf16.msra.mxu0 0
        %422 = vmatprep.subr.bf16.mxu0 0
        %423 = vmatpush1.bf16.msra.mxu0 0
        %424 = vmatprep.subr.bf16.mxu0 0
        %425 = vmatpush1.bf16.msra.mxu0 0
        %426 = vmatprep.subr.bf16.mxu0 0
        %427 = vmatpush1.bf16.msra.mxu0 0
        %428 = vmatprep.subr.bf16.mxu0 0
        %429 = vmatpush1.bf16.msra.mxu0 0
        %430 = vmatprep.mubr.bf16.mxu0 0
        %431 = vmatmul.mubr.bf16.gmra.mrb[0].mxu0 %v318
        %v432 = vpop.f32.mrb[0].mxu0
        %v433 = vadd.f32 0.0, %v432
        %v434 = vpop.f32.mrb[0].mxu0
        %v435 = vpop.f32.mrb[0].mxu0
        %v436 = vadd.f32 0.0, %v435
        %v437 = vpop.f32.mrb[0].mxu0
        %438 = vmatprep.mubr.bf16.mxu0 0
        %439 = vmatmul.mubr.bf16.gmra.mrb[0].mxu0 %v319
        %v440 = vpop.f32.mrb[0].mxu0
        %v441 = vadd.f32 0.0, %v440
        %v442 = vpop.f32.mrb[0].mxu0
        %v443 = vpop.f32.mrb[0].mxu0
        %v444 = vadd.f32 0.0, %v443
        %v445 = vpop.f32.mrb[0].mxu0
        %446 = vmatprep.mubr.bf16.mxu0 0
        %447 = vmatmul.mubr.bf16.gmra.mrb[0].mxu0 %v320
        %v448 = vpop.f32.mrb[0].mxu0
        %v449 = vadd.f32 0.0, %v448
        %v450 = vpop.f32.mrb[0].mxu0
        %v451 = vpop.f32.mrb[0].mxu0
        %v452 = vadd.f32 0.0, %v451
        %v453 = vpop.f32.mrb[0].mxu0
        %454 = vmatprep.mubr.bf16.mxu0 0
        %455 = vmatmul.mubr.bf16.gmra.mrb[0].mxu0 %v321
        %v456 = vpop.f32.mrb[0].mxu0
        %v457 = vadd.f32 0.0, %v456
        %v458 = vpop.f32.mrb[0].mxu0
        %v459 = vpop.f32.mrb[0].mxu0
        %v460 = vadd.f32 0.0, %v459
        %v461 = vpop.f32.mrb[0].mxu0
        %462 = vmatprep.mubr.bf16.mxu0 0
        %463 = vmatmul.mubr.bf16.gmra.mrb[0].mxu0 %v322
        %v464 = vpop.f32.mrb[0].mxu0
        %v465 = vadd.f32 0.0, %v464
        %v466 = vpop.f32.mrb[0].mxu0
        %v467 = vpop.f32.mrb[0].mxu0
        %v468 = vadd.f32 0.0, %v467
        %v469 = vpop.f32.mrb[0].mxu0
        %470 = vmatprep.mubr.bf16.mxu0 0
        %471 = vmatmul.mubr.bf16.gmra.mrb[0].mxu0 %v323
        %v472 = vpop.f32.mrb[0].mxu0
        %v473 = vadd.f32 0.0, %v472
        %v474 = vpop.f32.mrb[0].mxu0
        %v475 = vpop.f32.mrb[0].mxu0
        %v476 = vadd.f32 0.0, %v475
        %v477 = vpop.f32.mrb[0].mxu0
        %478 = vmatprep.mubr.bf16.mxu0 0
        %479 = vmatmul.mubr.bf16.gmra.mrb[0].mxu0 %v324
        %v480 = vpop.f32.mrb[0].mxu0
        %v481 = vadd.f32 0.0, %v480
        %v482 = vpop.f32.mrb[0].mxu0
        %v483 = vpop.f32.mrb[0].mxu0
        %v484 = vadd.f32 0.0, %v483
        %v485 = vpop.f32.mrb[0].mxu0
        %486 = vmatprep.mubr.bf16.mxu0 0
        %487 = vmatmul.mubr.bf16.gmra.mrb[0].mxu0 %v325
        %v488 = vpop.f32.mrb[0].mxu0
        %v489 = vadd.f32 0.0, %v488
        %v490 = vpop.f32.mrb[0].mxu0
        %v491 = vpop.f32.mrb[0].mxu0
        %v492 = vadd.f32 0.0, %v491
        %v493 = vpop.f32.mrb[0].mxu0
        %494 = vmatprep.mubr.bf16.mxu0 0
        %495 = vmatmul.mubr.bf16.gmra.mrb[0].mxu0 %v326
        %v496 = vpop.f32.mrb[0].mxu0
        %v497 = vadd.f32 0.0, %v496
        %v498 = vpop.f32.mrb[0].mxu0
        %v499 = vpop.f32.mrb[0].mxu0
        %v500 = vadd.f32 0.0, %v499
        %v501 = vpop.f32.mrb[0].mxu0
        %502 = vmatprep.mubr.bf16.mxu0 0
        %503 = vmatmul.mubr.bf16.gmra.mrb[0].mxu0 %v327
        %v504 = vpop.f32.mrb[0].mxu0
        %v505 = vadd.f32 0.0, %v504
        %v506 = vpop.f32.mrb[0].mxu0
        %v507 = vpop.f32.mrb[0].mxu0
        %v508 = vadd.f32 0.0, %v507
        %v509 = vpop.f32.mrb[0].mxu0
        %510 = vmatprep.mubr.bf16.mxu0 0
        %511 = vmatmul.mubr.bf16.gmra.mrb[0].mxu0 %v328
        %v512 = vpop.f32.mrb[0].mxu0
        %v513 = vadd.f32 0.0, %v512
        %v514 = vpop.f32.mrb[0].mxu0
        %v515 = vpop.f32.mrb[0].mxu0
        %v516 = vadd.f32 0.0, %v515
        %v517 = vpop.f32.mrb[0].mxu0
        %518 = vmatprep.mubr.bf16.mxu0 0
        %519 = vmatmul.mubr.bf16.gmra.mrb[0].mxu0 %v329
        %v520 = vpop.f32.mrb[0].mxu0
        %v521 = vadd.f32 0.0, %v520
        %v522 = vpop.f32.mrb[0].mxu0
        %v523 = vpop.f32.mrb[0].mxu0
        %v524 = vadd.f32 0.0, %v523
        %v525 = vpop.f32.mrb[0].mxu0
        %526 = vmatprep.mubr.bf16.mxu0 0
        %527 = vmatmul.mubr.bf16.gmra.mrb[0].mxu0 %v330
        %v528 = vpop.f32.mrb[0].mxu0
        %v529 = vadd.f32 0.0, %v528
        %v530 = vpop.f32.mrb[0].mxu0
        %v531 = vpop.f32.mrb[0].mxu0
        %v532 = vadd.f32 0.0, %v531
        %v533 = vpop.f32.mrb[0].mxu0
        %534 = vmatprep.mubr.bf16.mxu0 0
        %535 = vmatmul.mubr.bf16.gmra.mrb[0].mxu0 %v331
        %v536 = vpop.f32.mrb[0].mxu0
        %v537 = vadd.f32 0.0, %v536
        %v538 = vpop.f32.mrb[0].mxu0
        %v539 = vpop.f32.mrb[0].mxu0
        %v540 = vadd.f32 0.0, %v539
        %v541 = vpop.f32.mrb[0].mxu0
        %542 = vmatprep.mubr.bf16.mxu0 0
        %543 = vmatmul.mubr.bf16.gmra.mrb[0].mxu0 %v332
        %v544 = vpop.f32.mrb[0].mxu0
        %v545 = vadd.f32 0.0, %v544
        %v546 = vpop.f32.mrb[0].mxu0
        %v547 = vpop.f32.mrb[0].mxu0
        %v548 = vadd.f32 0.0, %v547
        %v549 = vpop.f32.mrb[0].mxu0
        %550 = vmatprep.mubr.bf16.mxu0 0
        %551 = vmatmul.mubr.bf16.gmra.mrb[0].mxu0 %v333
        %v552 = vpop.f32.mrb[0].mxu0
        %v553 = vadd.f32 0.0, %v552
        %v554 = vpop.f32.mrb[0].mxu0
        %v555 = vpop.f32.mrb[0].mxu0
        %v556 = vadd.f32 0.0, %v555
        %v557 = vpop.f32.mrb[0].mxu0
        %558 = vdwg.mxu0
        %p559 = scmp.eq.s32.totalorder %s23, 0
        // Predicated region
        $region37: #{tpu_custom_call.1} parent=27 // pred_check
          %p560 = pneg %p559
        $region38: #{tpu_custom_call.1} parent=27 // pred_check_branch
          %562 = sbr.rel (%p560) target = $region40
        $region39: #{tpu_custom_call.1} parent=27 // pred_region
          %563 = vst [vmem:[#allocation8] sm:$0xff] 0.0
        $region40: #{tpu_custom_call.1} parent=27 // pred_fallthru
          _
        %s564 = smul.u32 %s23, 256
        %v565 = vlaneseq
        %v566 = vshrl.u32 %v565, 7
        %v567 = vadd.s32 %v566, 8
        %v568 = vadd.s32 %v566, 16
        %v569 = vadd.s32 %v566, 24
        %v570 = vadd.s32 %v566, 32
        %v571 = vadd.s32 %v566, 40
        %v572 = vadd.s32 %v566, 48
        %v573 = vadd.s32 %v566, 56
        %v574 = vadd.s32 %v566, 64
        %v575 = vadd.s32 %v566, 72
        %v576 = vadd.s32 %v566, 80
        %v577 = vadd.s32 %v566, 88
        %v578 = vadd.s32 %v566, 96
        %v579 = vadd.s32 %v566, 104
        %v580 = vadd.s32 %v566, 112
        %v581 = vadd.s32 %v566, 120
        %v582 = vadd.s32 %v566, 128
        %v583 = vadd.s32 %v566, 136
        %v584 = vadd.s32 %v566, 144
        %v585 = vadd.s32 %v566, 152
        %v586 = vadd.s32 %v566, 160
        %v587 = vadd.s32 %v566, 168
        %v588 = vadd.s32 %v566, 176
        %v589 = vadd.s32 %v566, 184
        %v590 = vadd.s32 %v566, 192
        %v591 = vadd.s32 %v566, 200
        %v592 = vadd.s32 %v566, 208
        %v593 = vadd.s32 %v566, 216
        %v594 = vadd.s32 %v566, 224
        %v595 = vadd.s32 %v566, 232
        %v596 = vadd.s32 %v566, 240
        %v597 = vadd.s32 %v566, 248
        %v598 = vstv %s564
        %v599 = vadd.s32 %v598, %v566
        %v600 = vadd.s32 %v598, %v567
        %v601 = vadd.s32 %v598, %v568
        %v602 = vadd.s32 %v598, %v569
        %v603 = vadd.s32 %v598, %v570
        %v604 = vadd.s32 %v598, %v571
        %v605 = vadd.s32 %v598, %v572
        %v606 = vadd.s32 %v598, %v573
        %v607 = vadd.s32 %v598, %v574
        %v608 = vadd.s32 %v598, %v575
        %v609 = vadd.s32 %v598, %v576
        %v610 = vadd.s32 %v598, %v577
        %v611 = vadd.s32 %v598, %v578
        %v612 = vadd.s32 %v598, %v579
        %v613 = vadd.s32 %v598, %v580
        %v614 = vadd.s32 %v598, %v581
        %v615 = vadd.s32 %v598, %v582
        %v616 = vadd.s32 %v598, %v583
        %v617 = vadd.s32 %v598, %v584
        %v618 = vadd.s32 %v598, %v585
        %v619 = vadd.s32 %v598, %v586
        %v620 = vadd.s32 %v598, %v587
        %v621 = vadd.s32 %v598, %v588
        %v622 = vadd.s32 %v598, %v589
        %v623 = vadd.s32 %v598, %v590
        %v624 = vadd.s32 %v598, %v591
        %v625 = vadd.s32 %v598, %v592
        %v626 = vadd.s32 %v598, %v593
        %v627 = vadd.s32 %v598, %v594
        %v628 = vadd.s32 %v598, %v595
        %v629 = vadd.s32 %v598, %v596
        %v630 = vadd.s32 %v598, %v597
        %vm631 = vcmp.lt.s32.totalorder %v599, 500
        %vm632 = vcmp.lt.s32.totalorder %v600, 500
        %vm633 = vcmp.lt.s32.totalorder %v601, 500
        %vm634 = vcmp.lt.s32.totalorder %v602, 500
        %vm635 = vcmp.lt.s32.totalorder %v603, 500
        %vm636 = vcmp.lt.s32.totalorder %v604, 500
        %vm637 = vcmp.lt.s32.totalorder %v605, 500
        %vm638 = vcmp.lt.s32.totalorder %v606, 500
        %vm639 = vcmp.lt.s32.totalorder %v607, 500
        %vm640 = vcmp.lt.s32.totalorder %v608, 500
        %vm641 = vcmp.lt.s32.totalorder %v609, 500
        %vm642 = vcmp.lt.s32.totalorder %v610, 500
        %vm643 = vcmp.lt.s32.totalorder %v611, 500
        %vm644 = vcmp.lt.s32.totalorder %v612, 500
        %vm645 = vcmp.lt.s32.totalorder %v613, 500
        %vm646 = vcmp.lt.s32.totalorder %v614, 500
        %vm647 = vcmp.lt.s32.totalorder %v615, 500
        %vm648 = vcmp.lt.s32.totalorder %v616, 500
        %vm649 = vcmp.lt.s32.totalorder %v617, 500
        %vm650 = vcmp.lt.s32.totalorder %v618, 500
        %vm651 = vcmp.lt.s32.totalorder %v619, 500
        %vm652 = vcmp.lt.s32.totalorder %v620, 500
        %vm653 = vcmp.lt.s32.totalorder %v621, 500
        %vm654 = vcmp.lt.s32.totalorder %v622, 500
        %vm655 = vcmp.lt.s32.totalorder %v623, 500
        %vm656 = vcmp.lt.s32.totalorder %v624, 500
        %vm657 = vcmp.lt.s32.totalorder %v625, 500
        %vm658 = vcmp.lt.s32.totalorder %v626, 500
        %vm659 = vcmp.lt.s32.totalorder %v627, 500
        %vm660 = vcmp.lt.s32.totalorder %v628, 500
        %vm661 = vcmp.lt.s32.totalorder %v629, 500
        %vm662 = vcmp.lt.s32.totalorder %v630, 500
        %v663 = vsel %vm631, %v433, 0.0
        %v664 = vsel %vm632, %v436, 0.0
        %v665 = vsel %vm633, %v441, 0.0
        %v666 = vsel %vm634, %v444, 0.0
        %v667 = vsel %vm635, %v449, 0.0
        %v668 = vsel %vm636, %v452, 0.0
        %v669 = vsel %vm637, %v457, 0.0
        %v670 = vsel %vm638, %v460, 0.0
        %v671 = vsel %vm639, %v465, 0.0
        %v672 = vsel %vm640, %v468, 0.0
        %v673 = vsel %vm641, %v473, 0.0
        %v674 = vsel %vm642, %v476, 0.0
        %v675 = vsel %vm643, %v481, 0.0
        %v676 = vsel %vm644, %v484, 0.0
        %v677 = vsel %vm645, %v489, 0.0
        %v678 = vsel %vm646, %v492, 0.0
        %v679 = vsel %vm647, %v497, 0.0
        %v680 = vsel %vm648, %v500, 0.0
        %v681 = vsel %vm649, %v505, 0.0
        %v682 = vsel %vm650, %v508, 0.0
        %v683 = vsel %vm651, %v513, 0.0
        %v684 = vsel %vm652, %v516, 0.0
        %v685 = vsel %vm653, %v521, 0.0
        %v686 = vsel %vm654, %v524, 0.0
        %v687 = vsel %vm655, %v529, 0.0
        %v688 = vsel %vm656, %v532, 0.0
        %v689 = vsel %vm657, %v537, 0.0
        %v690 = vsel %vm658, %v540, 0.0
        %v691 = vsel %vm659, %v545, 0.0
        %v692 = vsel %vm660, %v548, 0.0
        %v693 = vsel %vm661, %v553, 0.0
        %v694 = vsel %vm662, %v556, 0.0
        %v695 = vld [vmem:[#allocation8] sm:$0x1]
        %v696 = vadd.f32 %v663, %v664
        %v697 = vadd.f32 %v696, %v665
        %v698 = vadd.f32 %v697, %v666
        %v699 = vadd.f32 %v698, %v667
        %v700 = vadd.f32 %v699, %v668
        %v701 = vadd.f32 %v700, %v669
        %v702 = vadd.f32 %v701, %v670
        %v703 = vadd.f32 %v702, %v671
        %v704 = vadd.f32 %v703, %v672
        %v705 = vadd.f32 %v704, %v673
        %v706 = vadd.f32 %v705, %v674
        %v707 = vadd.f32 %v706, %v675
        %v708 = vadd.f32 %v707, %v676
        %v709 = vadd.f32 %v708, %v677
        %v710 = vadd.f32 %v709, %v678
        %v711 = vadd.f32 %v710, %v679
        %v712 = vadd.f32 %v711, %v680
        %v713 = vadd.f32 %v712, %v681
        %v714 = vadd.f32 %v713, %v682
        %v715 = vadd.f32 %v714, %v683
        %v716 = vadd.f32 %v715, %v684
        %v717 = vadd.f32 %v716, %v685
        %v718 = vadd.f32 %v717, %v686
        %v719 = vadd.f32 %v718, %v687
        %v720 = vadd.f32 %v719, %v688
        %v721 = vadd.f32 %v720, %v689
        %v722 = vadd.f32 %v721, %v690
        %v723 = vadd.f32 %v722, %v691
        %v724 = vadd.f32 %v723, %v692
        %v725 = vadd.f32 %v724, %v693
        %v726 = vadd.f32 %v725, %v694
        %v727 = vrot.slane %v726, 4
        %v728 = vadd.f32 %v726, %v727
        %v729 = vrot.slane %v728, 2
        %v730 = vadd.f32 %v728, %v729
        %v731 = vrot.slane %v730, 1
        %v732 = vadd.f32 %v730, %v731
        %v733 = vadd.f32 %v695, %v732
        %734 = vst [vmem:[#allocation8] sm:$0x1] %v733
        %v735 = vld [vmem:[#allocation8 + $0x1] sm:$0x1]
        %v736 = vmul.f32 %v663, %v663
        %v737 = vmul.f32 %v664, %v664
        %v738 = vmul.f32 %v665, %v665
        %v739 = vmul.f32 %v666, %v666
        %v740 = vmul.f32 %v667, %v667
        %v741 = vmul.f32 %v668, %v668
        %v742 = vmul.f32 %v669, %v669
        %v743 = vmul.f32 %v670, %v670
        %v744 = vmul.f32 %v671, %v671
        %v745 = vmul.f32 %v672, %v672
        %v746 = vmul.f32 %v673, %v673
        %v747 = vmul.f32 %v674, %v674
        %v748 = vmul.f32 %v675, %v675
        %v749 = vmul.f32 %v676, %v676
        %v750 = vmul.f32 %v677, %v677
        %v751 = vmul.f32 %v678, %v678
        %v752 = vmul.f32 %v679, %v679
        %v753 = vmul.f32 %v680, %v680
        %v754 = vmul.f32 %v681, %v681
        %v755 = vmul.f32 %v682, %v682
        %v756 = vmul.f32 %v683, %v683
        %v757 = vmul.f32 %v684, %v684
        %v758 = vmul.f32 %v685, %v685
        %v759 = vmul.f32 %v686, %v686
        %v760 = vmul.f32 %v687, %v687
        %v761 = vmul.f32 %v688, %v688
        %v762 = vmul.f32 %v689, %v689
        %v763 = vmul.f32 %v690, %v690
        %v764 = vmul.f32 %v691, %v691
        %v765 = vmul.f32 %v692, %v692
        %v766 = vmul.f32 %v693, %v693
        %v767 = vmul.f32 %v694, %v694
        %v768 = vadd.f32 %v736, %v737
        %v769 = vadd.f32 %v768, %v738
        %v770 = vadd.f32 %v769, %v739
        %v771 = vadd.f32 %v770, %v740
        %v772 = vadd.f32 %v771, %v741
        %v773 = vadd.f32 %v772, %v742
        %v774 = vadd.f32 %v773, %v743
        %v775 = vadd.f32 %v774, %v744
        %v776 = vadd.f32 %v775, %v745
        %v777 = vadd.f32 %v776, %v746
        %v778 = vadd.f32 %v777, %v747
        %v779 = vadd.f32 %v778, %v748
        %v780 = vadd.f32 %v779, %v749
        %v781 = vadd.f32 %v780, %v750
        %v782 = vadd.f32 %v781, %v751
        %v783 = vadd.f32 %v782, %v752
        %v784 = vadd.f32 %v783, %v753
        %v785 = vadd.f32 %v784, %v754
        %v786 = vadd.f32 %v785, %v755
        %v787 = vadd.f32 %v786, %v756
        %v788 = vadd.f32 %v787, %v757
        %v789 = vadd.f32 %v788, %v758
        %v790 = vadd.f32 %v789, %v759
        %v791 = vadd.f32 %v790, %v760
        %v792 = vadd.f32 %v791, %v761
        %v793 = vadd.f32 %v792, %v762
        %v794 = vadd.f32 %v793, %v763
        %v795 = vadd.f32 %v794, %v764
        %v796 = vadd.f32 %v795, %v765
        %v797 = vadd.f32 %v796, %v766
        %v798 = vadd.f32 %v797, %v767
        %v799 = vrot.slane %v798, 4
        %v800 = vadd.f32 %v798, %v799
        %v801 = vrot.slane %v800, 2
        %v802 = vadd.f32 %v800, %v801
        %v803 = vrot.slane %v802, 1
        %v804 = vadd.f32 %v802, %v803
        %v805 = vadd.f32 %v735, %v804
        %806 = vst [vmem:[#allocation8 + $0x1] sm:$0x1] %v805
        %v807 = vpack.c.bf16 %v436, %v433
        %v808 = vpack.c.bf16 %v444, %v441
        %v809 = vpack.c.bf16 %v452, %v449
        %v810 = vpack.c.bf16 %v460, %v457
        %v811 = vpack.c.bf16 %v468, %v465
        %v812 = vpack.c.bf16 %v476, %v473
        %v813 = vpack.c.bf16 %v484, %v481
        %v814 = vpack.c.bf16 %v492, %v489
        %v815 = vpack.c.bf16 %v500, %v497
        %v816 = vpack.c.bf16 %v508, %v505
        %v817 = vpack.c.bf16 %v516, %v513
        %v818 = vpack.c.bf16 %v524, %v521
        %v819 = vpack.c.bf16 %v532, %v529
        %v820 = vpack.c.bf16 %v540, %v537
        %v821 = vpack.c.bf16 %v548, %v545
        %v822 = vpack.c.bf16 %v556, %v553
        %v839 = vunpack.c.l.b16 %v807
        %v840 = vunpack.c.h.b16 %v807
        %v841 = vunpack.c.l.b16 %v808
        %v842 = vunpack.c.h.b16 %v808
        %v843 = vunpack.c.l.b16 %v809
        %v844 = vunpack.c.h.b16 %v809
        %v845 = vunpack.c.l.b16 %v810
        %v846 = vunpack.c.h.b16 %v810
        %v847 = vunpack.c.l.b16 %v811
        %v848 = vunpack.c.h.b16 %v811
        %v849 = vunpack.c.l.b16 %v812
        %v850 = vunpack.c.h.b16 %v812
        %v851 = vunpack.c.l.b16 %v813
        %v852 = vunpack.c.h.b16 %v813
        %v853 = vunpack.c.l.b16 %v814
        %v854 = vunpack.c.h.b16 %v814
        %v855 = vunpack.c.l.b16 %v815
        %v856 = vunpack.c.h.b16 %v815
        %v857 = vunpack.c.l.b16 %v816
        %v858 = vunpack.c.h.b16 %v816
        %v859 = vunpack.c.l.b16 %v817
        %v860 = vunpack.c.h.b16 %v817
        %v861 = vunpack.c.l.b16 %v818
        %v862 = vunpack.c.h.b16 %v818
        %v863 = vunpack.c.l.b16 %v819
        %v864 = vunpack.c.h.b16 %v819
        %v865 = vunpack.c.l.b16 %v820
        %v866 = vunpack.c.h.b16 %v820
        %v867 = vunpack.c.l.b16 %v821
        %v868 = vunpack.c.h.b16 %v821
        %v869 = vunpack.c.l.b16 %v822
        %v870 = vunpack.c.h.b16 %v822
        %v871 = vpack.c.b16 %v839, %v839
        %v872 = vpack.c.b16 %v840, %v840
        %v873 = vpack.c.b16 %v841, %v841
        %v874 = vpack.c.b16 %v842, %v842
        %v875 = vpack.c.b16 %v843, %v843
        %v876 = vpack.c.b16 %v844, %v844
        %v877 = vpack.c.b16 %v845, %v845
        %v878 = vpack.c.b16 %v846, %v846
        %v879 = vpack.c.b16 %v847, %v847
        %v880 = vpack.c.b16 %v848, %v848
        %v881 = vpack.c.b16 %v849, %v849
        %v882 = vpack.c.b16 %v850, %v850
        %v883 = vpack.c.b16 %v851, %v851
        %v884 = vpack.c.b16 %v852, %v852
        %v885 = vpack.c.b16 %v853, %v853
        %v886 = vpack.c.b16 %v854, %v854
        %v887 = vpack.c.b16 %v855, %v855
        %v888 = vpack.c.b16 %v856, %v856
        %v889 = vpack.c.b16 %v857, %v857
        %v890 = vpack.c.b16 %v858, %v858
        %v891 = vpack.c.b16 %v859, %v859
        %v892 = vpack.c.b16 %v860, %v860
        %v893 = vpack.c.b16 %v861, %v861
        %v894 = vpack.c.b16 %v862, %v862
        %v895 = vpack.c.b16 %v863, %v863
        %v896 = vpack.c.b16 %v864, %v864
        %v897 = vpack.c.b16 %v865, %v865
        %v898 = vpack.c.b16 %v866, %v866
        %v899 = vpack.c.b16 %v867, %v867
        %v900 = vpack.c.b16 %v868, %v868
        %v901 = vpack.c.b16 %v869, %v869
        %v902 = vpack.c.b16 %v870, %v870
        %935 = vst [vmem:[%s200] sm:$0xf] %v871
        %936 = vst [vmem:[%s200 + $0x4] sm:$0xf] %v872
        %937 = vst [vmem:[%s200 + $0x8] sm:$0xf] %v873
        %938 = vst [vmem:[%s200 + $0xc] sm:$0xf] %v874
        %939 = vst [vmem:[%s200 + $0x10] sm:$0xf] %v875
        %940 = vst [vmem:[%s200 + $0x14] sm:$0xf] %v876
        %941 = vst [vmem:[%s200 + $0x18] sm:$0xf] %v877
        %942 = vst [vmem:[%s200 + $0x1c] sm:$0xf] %v878
        %943 = vst [vmem:[%s200 + $0x20] sm:$0xf] %v879
        %944 = vst [vmem:[%s200 + $0x24] sm:$0xf] %v880
        %945 = vst [vmem:[%s200 + $0x28] sm:$0xf] %v881
        %946 = vst [vmem:[%s200 + $0x2c] sm:$0xf] %v882
        %947 = vst [vmem:[%s200 + $0x30] sm:$0xf] %v883
        %948 = vst [vmem:[%s200 + $0x34] sm:$0xf] %v884
        %949 = vst [vmem:[%s200 + $0x38] sm:$0xf] %v885
        %950 = vst [vmem:[%s200 + $0x3c] sm:$0xf] %v886
        %951 = vst [vmem:[%s200 + $0x40] sm:$0xf] %v887
        %952 = vst [vmem:[%s200 + $0x44] sm:$0xf] %v888
        %953 = vst [vmem:[%s200 + $0x48] sm:$0xf] %v889
        %954 = vst [vmem:[%s200 + $0x4c] sm:$0xf] %v890
        %955 = vst [vmem:[%s200 + $0x50] sm:$0xf] %v891
        %956 = vst [vmem:[%s200 + $0x54] sm:$0xf] %v892
        %957 = vst [vmem:[%s200 + $0x58] sm:$0xf] %v893
        %958 = vst [vmem:[%s200 + $0x5c] sm:$0xf] %v894
        %959 = vst [vmem:[%s200 + $0x60] sm:$0xf] %v895
        %960 = vst [vmem:[%s200 + $0x64] sm:$0xf] %v896
        %961 = vst [vmem:[%s200 + $0x68] sm:$0xf] %v897
        %962 = vst [vmem:[%s200 + $0x6c] sm:$0xf] %v898
        %963 = vst [vmem:[%s200 + $0x70] sm:$0xf] %v899
        %964 = vst [vmem:[%s200 + $0x74] sm:$0xf] %v900
        %965 = vst [vmem:[%s200 + $0x78] sm:$0xf] %v901
        %966 = vst [vmem:[%s200 + $0x7c] sm:$0xf] %v902
        %s967 = sand.u32 %s78, 1
        %s968 = scalar_lea.sflag [#allocation4], %s967
        %s969 = sand.u32 %s78, 1
        %s970 = smul.addr %s969, 128
        %s971 = scalar_lea.vmem [#allocation7], %s970
        // Predicated region
        $region41: #{tpu_custom_call.1} parent=27 // pred_check
          %p972 = pneg %p88
        $region42: #{tpu_custom_call.1} parent=27 // pred_check_branch
          %974 = sbr.rel (%p972) target = $region44
        $region43: #{tpu_custom_call.1} parent=27 // pred_region
          %s975 = smul.u32 32, %s23
          %s977 = ssub.s32 2048, 2048
          %978 = vsyncadd %s968, %s977
          %s979 = smul.addr %s975, 64
          %s980 = scalar_lea.hbm %s2, %s979
          %s981 = sshll.u32 %s971, 4
          %s982 = int_to_ptr.vmem [resolvable:$true] %s981
          %987 = dma.vmem_to_hbm [thread:$0]  %s982, 2048, %s980, %s968, 64, 64, 4
        $region44: #{tpu_custom_call.1} parent=27 // pred_fallthru
          _
        // Predicated region
        $region45: #{tpu_custom_call.1} parent=27 // pred_check
          %p988 = pneg %p109
        $region46: #{tpu_custom_call.1} parent=27 // pred_check_branch
          %990 = sbr.rel (%p988) target = $region48
        $region47: #{tpu_custom_call.1} parent=27 // pred_region
          %s992 = ssub.s32 128, 128
          %993 = vsyncadd [#allocation9], %s992
          %s995 = sshll.u32 [#allocation8], 4
          %s996 = int_to_ptr.vmem [resolvable:$true] %s995
          %998 = dma.vmem_to_hbm [thread:$0]  %s996, 128, %s3, [#allocation9]
        $region48: #{tpu_custom_call.1} parent=27 // pred_fallthru
          _
        // Predicated region
        $region49: #{tpu_custom_call.1} parent=27 // pred_check
          %p999 = pneg %p109
        $region50: #{tpu_custom_call.1} parent=27 // pred_check_branch
          %1001 = sbr.rel (%p999) target = $region52
        $region51: #{tpu_custom_call.1} parent=27 // pred_region
          %1002 = dma.done [#allocation9], 128
        $region52: #{tpu_custom_call.1} parent=27 // pred_fallthru
          _
      $region28: #{tpu_custom_call.1} parent=5 // pred_fallthru
        _
      %p1003 = scmp.le.s32.totalorder 2, %s18
      // Predicated region
      $region53: #{tpu_custom_call.1} parent=5 // pred_check
        %p1004 = pneg %p1003
      $region54: #{tpu_custom_call.1} parent=5 // pred_check_branch
        %1006 = sbr.rel (%p1004) target = $region56
      $region55: #{tpu_custom_call.1} parent=5 // pred_region
        %s1007 = ssub.s32 %s18, 2
        // Predicated region
        $region57: #{tpu_custom_call.1} parent=55 // pred_check
          %p1008 = pneg %p94
        $region58: #{tpu_custom_call.1} parent=55 // pred_check_branch
          %1010 = sbr.rel (%p1008) target = $region60
        $region59: #{tpu_custom_call.1} parent=55 // pred_region
          %s1011 = sand.u32 %s79, 1
          %s1012 = scalar_lea.sflag [#allocation4], %s1011
          %s1013 = sand.u32 %s79, 1
          %s1014 = smul.addr %s1013, 128
          %s1015 = scalar_lea.vmem [#allocation7], %s1014
          %1016 = dma.done %s1012, 2048
        $region60: #{tpu_custom_call.1} parent=55 // pred_fallthru
          _
      $region56: #{tpu_custom_call.1} parent=5 // pred_fallthru
        _
    $region6: #{tpu_custom_call.1} parent=1 // loop_footer
      %s22 = sadd.s32 1, %s18
    $region7: #{tpu_custom_call.1} parent=1 // loop_footer_branch
      %17 = sbr.rel target = $region3
    $region8: #{tpu_custom_call.1} parent=1 // loop_exit
      _
    %1017 = vsyncpa [#allocation3], 1
    %s1018 = scalar_lea.sflag [#allocation3], 1
    %1019 = vsyncpa %s1018, 1
    %1020 = vsyncpa [#allocation6], 1
    %1021 = vsyncpa [#allocation4], 1
    %s1022 = scalar_lea.sflag [#allocation4], 1
    %1023 = vsyncpa %s1022, 1
    %1024 = vsyncpa [#allocation9], 1

</llo_original>
